<compile_context>
chip_gen: v7x
topology: tpu7x:2x2x1
jax: 0.10.0
libtpu: 0.0.40
codegen_flags: <defaults>
</compile_context>

<pallas_src>
import jax
import jax.numpy as jnp
from jax.experimental import pallas as pl
from jax.experimental.pallas import tpu as pltpu

EPS = 1e-5


def _mlp_bn_kernel(x_ref, w1_ref, bn1_ref, w2_ref, bn2_ref, o_ref):
    x = x_ref[...]
    inv_b = 1.0 / x.shape[0]  # batch size is a compile-time constant

    # ---- fc1: (B, in) @ (in, hidden). Bias omitted (cancelled by bn1). ----
    # TODO(synk): cast matmul operands to bf16 (keep stats/rsqrt/sigmoid in
    # f32) once shapes grow enough for the MXU to matter (native bf16 path on
    # v6e/v7x; on v5e confine bf16 strictly to the MXU operands).
    h = jnp.dot(x, w1_ref[...], preferred_element_type=jnp.float32)

    # ---- bn1: one-pass stats folded into a per-feature scale/shift ----
    mu1 = jnp.sum(h, axis=0, keepdims=True) * inv_b
    ex2_1 = jnp.sum(h * h, axis=0, keepdims=True) * inv_b
    var1 = jnp.maximum(ex2_1 - mu1 * mu1, 0.0)      # guard cancellation
    s1 = bn1_ref[0:1, :] * jax.lax.rsqrt(var1 + EPS)   # gamma row
    t1 = bn1_ref[1:2, :] - mu1 * s1                    # beta row
    h = jnp.maximum(h * s1 + t1, 0.0)                  # normalize+affine+ReLU

    # ---- fc2: (B, hidden) @ (hidden, out). Bias omitted (cancelled by bn2). ----
    y = jnp.dot(h, w2_ref[...], preferred_element_type=jnp.float32)

    # ---- bn2 (same folded form) ----
    mu2 = jnp.sum(y, axis=0, keepdims=True) * inv_b
    ex2_2 = jnp.sum(y * y, axis=0, keepdims=True) * inv_b
    var2 = jnp.maximum(ex2_2 - mu2 * mu2, 0.0)
    s2 = bn2_ref[0:1, :] * jax.lax.rsqrt(var2 + EPS)
    t2 = bn2_ref[1:2, :] - mu2 * s2

    # ---- Sigmoid (EUP) ----
    o_ref[...] = jax.nn.sigmoid(y * s2 + t2)


@jax.jit
def neural_net_forward(x, prepared):
    """x: (B, input_size) f32. prepared: output of prepare_params (pre-packed)."""
    B = x.shape[0]
    out_size = prepared["w2t"].shape[1]
    vmem_spec = pl.BlockSpec(memory_space=pltpu.MemorySpace.VMEM)

    # Whole-array VMEM blocks, no grid: every operand (~10 KB total at these
    # shapes) fits in VMEM on all generations; the call is launch/DMA bound.
    # TODO(synk): if B or the feature sizes grow, reintroduce a tiled grid
    # (feature-axis "parallel" split to engage the second v7x TensorCore, and
    # a B-tiled two-pass BN sized against the 64 MiB v7x VMEM ceiling).
    return pl.pallas_call(
        _mlp_bn_kernel,
        out_shape=jax.ShapeDtypeStruct((B, out_size), jnp.float32),
        in_specs=[vmem_spec] * 5,
        out_specs=vmem_spec,
    )(x, prepared["w1t"], prepared["bn1"], prepared["w2t"], prepared["bn2"])


def init_params(key, input_size, hidden_size, output_size):
    k1, k2, k3, k4 = jax.random.split(key, 4)
    # Deterministic synthetic init (shapes match the PyTorch module).
    w1 = jax.random.normal(k1, (hidden_size, input_size), jnp.float32) * 0.1
    b1 = jax.random.normal(k2, (hidden_size,), jnp.float32) * 0.05
    w2 = jax.random.normal(k3, (output_size, hidden_size), jnp.float32) * 0.1
    b2 = jax.random.normal(k4, (output_size,), jnp.float32) * 0.05
    # BatchNorm affine params (PyTorch default: gamma=1, beta=0).
    g1 = jnp.ones((hidden_size,), jnp.float32)
    be1 = jnp.zeros((hidden_size,), jnp.float32)
    g2 = jnp.ones((output_size,), jnp.float32)
    be2 = jnp.zeros((output_size,), jnp.float32)
    return {
        "w1t": w1.T,                       # (input, hidden)
        "b1": b1.reshape(1, hidden_size),  # reference only (cancelled by bn1)
        "g1": g1.reshape(1, hidden_size),
        "be1": be1.reshape(1, hidden_size),
        "w2t": w2.T,                       # (hidden, output)
        "b2": b2.reshape(1, output_size),  # reference only (cancelled by bn2)
        "g2": g2.reshape(1, output_size),
        "be2": be2.reshape(1, output_size),
    }


def prepare_params(params):
    """One-time packing of kernel operands (hoisted out of the per-call path)."""
    return {
        "w1t": params["w1t"],                                         # (in, hidden)
        "bn1": jnp.concatenate([params["g1"], params["be1"]], axis=0),  # (2, hidden)
        "w2t": params["w2t"],                                         # (hidden, out)
        "bn2": jnp.concatenate([params["g2"], params["be2"]], axis=0),  # (2, out)
    }


def _reference(x, p):
    """Faithful PyTorch-style forward (with biases, two-pass BN stats)."""
    h = x @ p["w1t"] + p["b1"]
    mu = h.mean(0, keepdims=True)
    var = ((h - mu) ** 2).mean(0, keepdims=True)
    h = (h - mu) / jnp.sqrt(var + EPS) * p["g1"] + p["be1"]
    h = jnp.maximum(h, 0.0)
    y = h @ p["w2t"] + p["b2"]
    mu2 = y.mean(0, keepdims=True)
    var2 = ((y - mu2) ** 2).mean(0, keepdims=True)
    y = (y - mu2) / jnp.sqrt(var2 + EPS) * p["g2"] + p["be2"]
    return jax.nn.sigmoid(y)


if __name__ == "__main__":
    B, INPUT_SIZE, HIDDEN_SIZE, OUTPUT_SIZE = 8, 16, 64, 1

    key = jax.random.PRNGKey(0)
    kx, kp = jax.random.split(key)
    # Mimic MinMaxScaler output range [0, 1].
    x = jax.random.uniform(kx, (B, INPUT_SIZE), jnp.float32)
    params = init_params(kp, INPUT_SIZE, HIDDEN_SIZE, OUTPUT_SIZE)
    prepared = prepare_params(params)  # one-time; reused across all forwards

    out = jax.block_until_ready(neural_net_forward(x, prepared))
    ref = _reference(x, params)

    assert out.shape == (B, OUTPUT_SIZE)
    # Tolerance covers float reassociation from the (mathematically exact)
    # bias cancellation and the one-pass E[x^2]-mu^2 variance.
    assert jnp.allclose(out, ref, atol=1e-4, rtol=1e-4), (out, ref)

    print("KERNEL_OK")
</pallas_src>

<mosaic_0001>
module attributes {stable_mosaic.version = 11 : i64} {
  func.func @_mlp_bn_kernel(%arg0: memref<8x16xf32, #tpu.memory_space<vmem>>, %arg1: memref<16x64xf32, #tpu.memory_space<vmem>>, %arg2: memref<2x64xf32, #tpu.memory_space<vmem>>, %arg3: memref<64x1xf32, #tpu.memory_space<vmem>>, %arg4: memref<2x1xf32, #tpu.memory_space<vmem>>, %arg5: memref<8x1xf32, #tpu.memory_space<vmem>>) attributes {dimension_semantics = [], scalar_prefetch = 0 : i64, scratch_operands = 0 : i64, tpu.core_type = #tpu.core_type<tc>} {
    %c0 = arith.constant 0 : index
    %c0_0 = arith.constant 0 : index
    %0 = vector.load %arg0[%c0, %c0_0] : memref<8x16xf32, #tpu.memory_space<vmem>>, vector<8x16xf32>
    %c0_1 = arith.constant 0 : index
    %c0_2 = arith.constant 0 : index
    %1 = vector.load %arg1[%c0_1, %c0_2] : memref<16x64xf32, #tpu.memory_space<vmem>>, vector<16x64xf32>
    %cst = arith.constant dense<0.000000e+00> : vector<8x64xf32>
    %2 = tpu.matmul %0, %1, %cst {dimension_numbers = #tpu.dot_dimension_numbers<[1], [0], [0], [1], [0, 0, 1, 1], [], []>} : vector<8x16xf32>, vector<16x64xf32>, vector<8x64xf32> -> vector<8x64xf32>
    %cst_3 = arith.constant dense<0.000000e+00> : vector<64xf32>
    %3 = vector.multi_reduction <add>, %2, %cst_3 [0] : vector<8x64xf32> to vector<64xf32>
    %4 = vector.shape_cast %3 : vector<64xf32> to vector<1x64xf32>
    %cst_4 = arith.constant 1.250000e-01 : f32
    %5 = vector.broadcast %cst_4 : f32 to vector<1x64xf32>
    %6 = arith.mulf %4, %5 : vector<1x64xf32>
    %7 = arith.mulf %2, %2 : vector<8x64xf32>
    %cst_5 = arith.constant dense<0.000000e+00> : vector<64xf32>
    %8 = vector.multi_reduction <add>, %7, %cst_5 [0] : vector<8x64xf32> to vector<64xf32>
    %9 = vector.shape_cast %8 : vector<64xf32> to vector<1x64xf32>
    %cst_6 = arith.constant 1.250000e-01 : f32
    %10 = vector.broadcast %cst_6 : f32 to vector<1x64xf32>
    %11 = arith.mulf %9, %10 : vector<1x64xf32>
    %12 = arith.mulf %6, %6 : vector<1x64xf32>
    %13 = arith.subf %11, %12 : vector<1x64xf32>
    %cst_7 = arith.constant 0.000000e+00 : f32
    %14 = vector.broadcast %cst_7 : f32 to vector<1x64xf32>
    %15 = arith.maximumf %13, %14 : vector<1x64xf32>
    %c0_8 = arith.constant 0 : index
    %c0_9 = arith.constant 0 : index
    %16 = vector.load %arg2[%c0_8, %c0_9] : memref<2x64xf32, #tpu.memory_space<vmem>>, vector<1x64xf32>
    %cst_10 = arith.constant 9.99999974E-6 : f32
    %17 = vector.broadcast %cst_10 : f32 to vector<1x64xf32>
    %18 = arith.addf %15, %17 : vector<1x64xf32>
    %19 = math.rsqrt %18 : vector<1x64xf32>
    %20 = arith.mulf %16, %19 : vector<1x64xf32>
    %c1 = arith.constant 1 : index
    %c0_11 = arith.constant 0 : index
    %21 = vector.load %arg2[%c1, %c0_11] : memref<2x64xf32, #tpu.memory_space<vmem>>, vector<1x64xf32>
    %22 = arith.mulf %6, %20 : vector<1x64xf32>
    %23 = arith.subf %21, %22 : vector<1x64xf32>
    %24 = vector.broadcast %20 : vector<1x64xf32> to vector<8x64xf32>
    %25 = arith.mulf %2, %24 : vector<8x64xf32>
    %26 = vector.broadcast %23 : vector<1x64xf32> to vector<8x64xf32>
    %27 = arith.addf %25, %26 : vector<8x64xf32>
    %cst_12 = arith.constant 0.000000e+00 : f32
    %28 = vector.broadcast %cst_12 : f32 to vector<8x64xf32>
    %29 = arith.maximumf %27, %28 : vector<8x64xf32>
    %c0_13 = arith.constant 0 : index
    %c0_14 = arith.constant 0 : index
    %30 = vector.load %arg3[%c0_13, %c0_14] : memref<64x1xf32, #tpu.memory_space<vmem>>, vector<64x1xf32>
    %cst_15 = arith.constant dense<0.000000e+00> : vector<8x1xf32>
    %31 = tpu.matmul %29, %30, %cst_15 {dimension_numbers = #tpu.dot_dimension_numbers<[1], [0], [0], [1], [0, 0, 1, 1], [], []>} : vector<8x64xf32>, vector<64x1xf32>, vector<8x1xf32> -> vector<8x1xf32>
    %cst_16 = arith.constant dense<0.000000e+00> : vector<1xf32>
    %32 = vector.multi_reduction <add>, %31, %cst_16 [0] : vector<8x1xf32> to vector<1xf32>
    %33 = vector.shape_cast %32 : vector<1xf32> to vector<1x1xf32>
    %cst_17 = arith.constant 1.250000e-01 : f32
    %34 = vector.broadcast %cst_17 : f32 to vector<1x1xf32>
    %35 = arith.mulf %33, %34 : vector<1x1xf32>
    %36 = arith.mulf %31, %31 : vector<8x1xf32>
    %cst_18 = arith.constant dense<0.000000e+00> : vector<1xf32>
    %37 = vector.multi_reduction <add>, %36, %cst_18 [0] : vector<8x1xf32> to vector<1xf32>
    %38 = vector.shape_cast %37 : vector<1xf32> to vector<1x1xf32>
    %cst_19 = arith.constant 1.250000e-01 : f32
    %39 = vector.broadcast %cst_19 : f32 to vector<1x1xf32>
    %40 = arith.mulf %38, %39 : vector<1x1xf32>
    %41 = arith.mulf %35, %35 : vector<1x1xf32>
    %42 = arith.subf %40, %41 : vector<1x1xf32>
    %cst_20 = arith.constant 0.000000e+00 : f32
    %43 = vector.broadcast %cst_20 : f32 to vector<1x1xf32>
    %44 = arith.maximumf %42, %43 : vector<1x1xf32>
    %c0_21 = arith.constant 0 : index
    %c0_22 = arith.constant 0 : index
    %45 = vector.load %arg4[%c0_21, %c0_22] : memref<2x1xf32, #tpu.memory_space<vmem>>, vector<1x1xf32>
    %cst_23 = arith.constant 9.99999974E-6 : f32
    %46 = vector.broadcast %cst_23 : f32 to vector<1x1xf32>
    %47 = arith.addf %44, %46 : vector<1x1xf32>
    %48 = math.rsqrt %47 : vector<1x1xf32>
    %49 = arith.mulf %45, %48 : vector<1x1xf32>
    %c1_24 = arith.constant 1 : index
    %c0_25 = arith.constant 0 : index
    %50 = vector.load %arg4[%c1_24, %c0_25] : memref<2x1xf32, #tpu.memory_space<vmem>>, vector<1x1xf32>
    %51 = arith.mulf %35, %49 : vector<1x1xf32>
    %52 = arith.subf %50, %51 : vector<1x1xf32>
    %53 = vector.broadcast %49 : vector<1x1xf32> to vector<8x1xf32>
    %54 = arith.mulf %31, %53 : vector<8x1xf32>
    %55 = vector.broadcast %52 : vector<1x1xf32> to vector<8x1xf32>
    %56 = arith.addf %54, %55 : vector<8x1xf32>
    %57 = arith.negf %56 : vector<8x1xf32>
    %58 = math.exp %57 : vector<8x1xf32>
    %cst_26 = arith.constant 1.000000e+00 : f32
    %59 = vector.broadcast %cst_26 : f32 to vector<8x1xf32>
    %60 = arith.addf %59, %58 : vector<8x1xf32>
    %61 = arith.divf %59, %60 : vector<8x1xf32>
    %c0_27 = arith.constant 0 : index
    %c0_28 = arith.constant 0 : index
    %62 = vector.load %arg5[%c0_27, %c0_28] : memref<8x1xf32, #tpu.memory_space<vmem>>, vector<8x1xf32>
    tpu.vector_store %arg5[%c0_27, %c0_28], %61 {strides = array<i32>} : memref<8x1xf32, #tpu.memory_space<vmem>>, vector<8x1xf32>,
    return
  }
}

</mosaic_0001>

<llo_original>
// kernel: neural_net_forward.1
$region0: #{neural_net_forward.1}
  #allocation0 [shape = 'u32[]', space=smem, size = 0x4, offset = 0x4, fixed_abs, tag = 'smem constant byte address 0x4 - core index']
  #allocation1 [shape = 'u32[144,128]{1,0:T(1,128)}', space=vmem, size = 0x12000, scoped, tag = 'internal scratch']
  %s0 = inlined_call_operand.vmem [shape: f32[8,16], index: 0, kind: input, shape index: {}]
  %s1 = inlined_call_operand.vmem [shape: f32[16,64], index: 1, kind: input, shape index: {}]
  %s2 = inlined_call_operand.vmem [shape: f32[2,64], index: 2, kind: input, shape index: {}]
  %s3 = inlined_call_operand.vmem [shape: f32[64,1], index: 3, kind: input, shape index: {}]
  %s4 = inlined_call_operand.vmem [shape: f32[2,1], index: 4, kind: input, shape index: {}]
  %s5 = inlined_call_operand.vmem [shape: f32[8,1], index: 5, kind: output, shape index: {}]
  %s6 = sld [smem:[#allocation0]]
  $region30: #{neural_net_forward.1} parent=0
    _
  %s8 = ssub.s32 1, %s6
  %s9 = scalar_select 0, %s8, %s6
  // Predicated region
  $region2: #{neural_net_forward.1} parent=0 // pred_check
    _
  $region3: #{neural_net_forward.1} parent=0 // pred_check_branch
    %11 = sbr.rel (0) target = $region5
  $region4: #{neural_net_forward.1} parent=0 // pred_region
    _
  $region5: #{neural_net_forward.1} parent=0 // pred_fallthru
    _
  // Predicated region
  $region6: #{neural_net_forward.1} parent=0 // pred_check
    _
  $region7: #{neural_net_forward.1} parent=0 // pred_check_branch
    %13 = sbr.rel (0) target = $region9
  $region8: #{neural_net_forward.1} parent=0 // pred_region
    _
  $region9: #{neural_net_forward.1} parent=0 // pred_fallthru
    _
  // Predicated region
  $region10: #{neural_net_forward.1} parent=0 // pred_check
    _
  $region11: #{neural_net_forward.1} parent=0 // pred_check_branch
    %15 = sbr.rel (0) target = $region13
  $region12: #{neural_net_forward.1} parent=0 // pred_region
    _
  $region13: #{neural_net_forward.1} parent=0 // pred_fallthru
    _
  // Predicated region
  $region14: #{neural_net_forward.1} parent=0 // pred_check
    _
  $region15: #{neural_net_forward.1} parent=0 // pred_check_branch
    %17 = sbr.rel (0) target = $region17
  $region16: #{neural_net_forward.1} parent=0 // pred_region
    _
  $region17: #{neural_net_forward.1} parent=0 // pred_fallthru
    _
  // Predicated region
  $region18: #{neural_net_forward.1} parent=0 // pred_check
    _
  $region19: #{neural_net_forward.1} parent=0 // pred_check_branch
    %19 = sbr.rel (0) target = $region21
  $region20: #{neural_net_forward.1} parent=0 // pred_region
    _
  $region21: #{neural_net_forward.1} parent=0 // pred_fallthru
    _
  %v20 = vld [vmem:[%s0] sm:$0xff]
  %v21 = vld [vmem:[%s1] sm:$0xff]
  %v22 = vld [vmem:[%s1 + $0x8] sm:$0xff]
  %vm23 = vcmask 130048
  %v25 = vsel %vm23, %v20, 0
  %27 = vmatprep.subr.mxu0 0.0
  %28 = vmatpush1.msra.mxu0 %v21
  %29 = vmatprep.subr.mxu0 0.0
  %30 = vmatpush1.msra.mxu0 %v22
  %31 = vmatprep.subr.mxu0 0.0
  %32 = vmatpush1.msra.mxu0 0.0
  %33 = vmatprep.subr.mxu0 0.0
  %34 = vmatpush1.msra.mxu0 0.0
  %35 = vmatprep.subr.mxu0 0.0
  %36 = vmatpush1.msra.mxu0 0.0
  %37 = vmatprep.subr.mxu0 0.0
  %38 = vmatpush1.msra.mxu0 0.0
  %39 = vmatprep.subr.mxu0 0.0
  %40 = vmatpush1.msra.mxu0 0.0
  %41 = vmatprep.subr.mxu0 0.0
  %42 = vmatpush1.msra.mxu0 0.0
  %43 = vmatprep.subr.mxu0 0.0
  %44 = vmatpush1.msra.mxu0 0.0
  %45 = vmatprep.subr.mxu0 0.0
  %46 = vmatpush1.msra.mxu0 0.0
  %47 = vmatprep.subr.mxu0 0.0
  %48 = vmatpush1.msra.mxu0 0.0
  %49 = vmatprep.subr.mxu0 0.0
  %50 = vmatpush1.msra.mxu0 0.0
  %51 = vmatprep.subr.mxu0 0.0
  %52 = vmatpush1.msra.mxu0 0.0
  %53 = vmatprep.subr.mxu0 0.0
  %54 = vmatpush1.msra.mxu0 0.0
  %55 = vmatprep.subr.mxu0 0.0
  %56 = vmatpush1.msra.mxu0 0.0
  %57 = vmatprep.subr.mxu0 0.0
  %58 = vmatpush1.msra.mxu0 0.0
  %59 = vmatprep.subr.mxu0 0.0
  %60 = vmatpush1.msra.mxu0 0.0
  %61 = vmatprep.subr.mxu0 0.0
  %62 = vmatpush1.msra.mxu0 0.0
  %63 = vmatprep.subr.mxu0 0.0
  %64 = vmatpush1.msra.mxu0 0.0
  %65 = vmatprep.subr.mxu0 0.0
  %66 = vmatpush1.msra.mxu0 0.0
  %67 = vmatprep.subr.mxu0 0.0
  %68 = vmatpush1.msra.mxu0 0.0
  %69 = vmatprep.subr.mxu0 0.0
  %70 = vmatpush1.msra.mxu0 0.0
  %71 = vmatprep.subr.mxu0 0.0
  %72 = vmatpush1.msra.mxu0 0.0
  %73 = vmatprep.subr.mxu0 0.0
  %74 = vmatpush1.msra.mxu0 0.0
  %75 = vmatprep.subr.mxu0 0.0
  %76 = vmatpush1.msra.mxu0 0.0
  %77 = vmatprep.subr.mxu0 0.0
  %78 = vmatpush1.msra.mxu0 0.0
  %79 = vmatprep.subr.mxu0 0.0
  %80 = vmatpush1.msra.mxu0 0.0
  %81 = vmatprep.subr.mxu0 0.0
  %82 = vmatpush1.msra.mxu0 0.0
  %83 = vmatprep.subr.mxu0 0.0
  %84 = vmatpush1.msra.mxu0 0.0
  %85 = vmatprep.subr.mxu0 0.0
  %86 = vmatpush1.msra.mxu0 0.0
  %87 = vmatprep.subr.mxu0 0.0
  %88 = vmatpush1.msra.mxu0 0.0
  %89 = vmatprep.subr.mxu0 0.0
  %90 = vmatpush1.msra.mxu0 0.0
  %91 = vmatprep.mubr.f32.mxu0 0.0
  %92 = vmatmul.mubr.f32.gmra.mrb[0].mxu0 %v25
  %v93 = vpop.f32.mrb[0].mxu0
  %v94 = vadd.f32 0.0, %v93
  %v95 = vpop.f32.mrb[0].mxu0
  %96 = vdwg.mxu0
  %vm97 = vcmask 523264
  %v98 = vsel %vm97, %v94, 0.0
  %v99 = vrot.slane %v98, 4
  %v100 = vadd.f32 %v98, %v99
  %v101 = vrot.slane %v100, 2
  %v102 = vadd.f32 %v100, %v101
  %v103 = vrot.slane %v102, 1
  %v104 = vadd.f32 %v102, %v103
  %v105 = vmul.f32 %v104, 0.125
  %v106 = vmul.f32 %v94, %v94
  %v107 = vsel %vm97, %v106, 0.0
  %v108 = vrot.slane %v107, 4
  %v109 = vadd.f32 %v107, %v108
  %v110 = vrot.slane %v109, 2
  %v111 = vadd.f32 %v109, %v110
  %v112 = vrot.slane %v111, 1
  %v113 = vadd.f32 %v111, %v112
  %v114 = vmul.f32 %v113, 0.125
  %v115 = vmul.f32 %v105, %v105
  %v116 = vsub.f32 %v114, %v115
  %v117 = vmax.f32 %v116, 0.0
  %v118 = vld [vmem:[%s2] sm:$0x1]
  %v119 = vadd.f32 %v117, 1e-05
  %v120 = vrsqrt.pop %v119
  %v121 = vmul.f32 %v118, %v120
  %v122 = vld [vmem:[%s2 + $0x1] sm:$0x1]
  %v123 = vmul.f32 %v105, %v121
  %v124 = vsub.f32 %v122, %v123
  %v125 = vlaneseq
  %v126 = vshrl.u32 %v125, 7
  %v127 = vsub.s32 0, %v126
  %v128 = vrot.slane %v121, %v127
  %v129 = vmul.f32 %v94, %v128
  %v130 = vlaneseq
  %v131 = vshrl.u32 %v130, 7
  %v132 = vsub.s32 0, %v131
  %v133 = vrot.slane %v124, %v132
  %v134 = vadd.f32 %v129, %v133
  %v135 = vmax.f32 %v134, 0.0
  %v136 = vld [vmem:[%s3] sm:$0xff]
  %v137 = vld [vmem:[%s3 + $0x8] sm:$0xff]
  %v138 = vld [vmem:[%s3 + $0x10] sm:$0xff]
  %v139 = vld [vmem:[%s3 + $0x18] sm:$0xff]
  %v140 = vld [vmem:[%s3 + $0x20] sm:$0xff]
  %v141 = vld [vmem:[%s3 + $0x28] sm:$0xff]
  %v142 = vld [vmem:[%s3 + $0x30] sm:$0xff]
  %v143 = vld [vmem:[%s3 + $0x38] sm:$0xff]
  %v145 = vsel %vm97, %v135, 0
  %147 = vmatprep.subr.mxu0 0.0
  %148 = vmatpush1.msra.mxu0 %v136
  %149 = vmatprep.subr.mxu0 0.0
  %150 = vmatpush1.msra.mxu0 %v137
  %151 = vmatprep.subr.mxu0 0.0
  %152 = vmatpush1.msra.mxu0 %v138
  %153 = vmatprep.subr.mxu0 0.0
  %154 = vmatpush1.msra.mxu0 %v139
  %155 = vmatprep.subr.mxu0 0.0
  %156 = vmatpush1.msra.mxu0 %v140
  %157 = vmatprep.subr.mxu0 0.0
  %158 = vmatpush1.msra.mxu0 %v141
  %159 = vmatprep.subr.mxu0 0.0
  %160 = vmatpush1.msra.mxu0 %v142
  %161 = vmatprep.subr.mxu0 0.0
  %162 = vmatpush1.msra.mxu0 %v143
  %163 = vmatprep.subr.mxu0 0.0
  %164 = vmatpush1.msra.mxu0 0.0
  %165 = vmatprep.subr.mxu0 0.0
  %166 = vmatpush1.msra.mxu0 0.0
  %167 = vmatprep.subr.mxu0 0.0
  %168 = vmatpush1.msra.mxu0 0.0
  %169 = vmatprep.subr.mxu0 0.0
  %170 = vmatpush1.msra.mxu0 0.0
  %171 = vmatprep.subr.mxu0 0.0
  %172 = vmatpush1.msra.mxu0 0.0
  %173 = vmatprep.subr.mxu0 0.0
  %174 = vmatpush1.msra.mxu0 0.0
  %175 = vmatprep.subr.mxu0 0.0
  %176 = vmatpush1.msra.mxu0 0.0
  %177 = vmatprep.subr.mxu0 0.0
  %178 = vmatpush1.msra.mxu0 0.0
  %179 = vmatprep.subr.mxu0 0.0
  %180 = vmatpush1.msra.mxu0 0.0
  %181 = vmatprep.subr.mxu0 0.0
  %182 = vmatpush1.msra.mxu0 0.0
  %183 = vmatprep.subr.mxu0 0.0
  %184 = vmatpush1.msra.mxu0 0.0
  %185 = vmatprep.subr.mxu0 0.0
  %186 = vmatpush1.msra.mxu0 0.0
  %187 = vmatprep.subr.mxu0 0.0
  %188 = vmatpush1.msra.mxu0 0.0
  %189 = vmatprep.subr.mxu0 0.0
  %190 = vmatpush1.msra.mxu0 0.0
  %191 = vmatprep.subr.mxu0 0.0
  %192 = vmatpush1.msra.mxu0 0.0
  %193 = vmatprep.subr.mxu0 0.0
  %194 = vmatpush1.msra.mxu0 0.0
  %195 = vmatprep.subr.mxu0 0.0
  %196 = vmatpush1.msra.mxu0 0.0
  %197 = vmatprep.subr.mxu0 0.0
  %198 = vmatpush1.msra.mxu0 0.0
  %199 = vmatprep.subr.mxu0 0.0
  %200 = vmatpush1.msra.mxu0 0.0
  %201 = vmatprep.subr.mxu0 0.0
  %202 = vmatpush1.msra.mxu0 0.0
  %203 = vmatprep.subr.mxu0 0.0
  %204 = vmatpush1.msra.mxu0 0.0
  %205 = vmatprep.subr.mxu0 0.0
  %206 = vmatpush1.msra.mxu0 0.0
  %207 = vmatprep.subr.mxu0 0.0
  %208 = vmatpush1.msra.mxu0 0.0
  %209 = vmatprep.subr.mxu0 0.0
  %210 = vmatpush1.msra.mxu0 0.0
  %211 = vmatprep.mubr.f32.mxu0 0.0
  %212 = vmatmul.mubr.f32.gmra.mrb[0].mxu0 %v145
  %v213 = vpop.f32.mrb[0].mxu0
  %v214 = vadd.f32 0.0, %v213
  %v215 = vpop.f32.mrb[0].mxu0
  %216 = vdwg.mxu0
  %vm217 = vcmask 7168
  %v218 = vsel %vm217, %v214, 0.0
  %v219 = vrot.slane %v218, 4
  %v220 = vadd.f32 %v218, %v219
  %v221 = vrot.slane %v220, 2
  %v222 = vadd.f32 %v220, %v221
  %v223 = vrot.slane %v222, 1
  %v224 = vadd.f32 %v222, %v223
  %v225 = vmul.f32 %v224, 0.125
  %v226 = vmul.f32 %v214, %v214
  %v227 = vsel %vm217, %v226, 0.0
  %v228 = vrot.slane %v227, 4
  %v229 = vadd.f32 %v227, %v228
  %v230 = vrot.slane %v229, 2
  %v231 = vadd.f32 %v229, %v230
  %v232 = vrot.slane %v231, 1
  %v233 = vadd.f32 %v231, %v232
  %v234 = vmul.f32 %v233, 0.125
  %v235 = vmul.f32 %v225, %v225
  %v236 = vsub.f32 %v234, %v235
  %v237 = vmax.f32 %v236, 0.0
  %v238 = vld [vmem:[%s4] sm:$0x1]
  %v239 = vadd.f32 %v237, 1e-05
  %v240 = vrsqrt.pop %v239
  %v241 = vmul.f32 %v238, %v240
  %v242 = vld [vmem:[%s4 + $0x1] sm:$0x1]
  %v243 = vmul.f32 %v225, %v241
  %v244 = vsub.f32 %v242, %v243
  %v245 = vlaneseq
  %v246 = vshrl.u32 %v245, 7
  %v247 = vsub.s32 0, %v246
  %v248 = vrot.slane %v241, %v247
  %v249 = vmul.f32 %v214, %v248
  %v250 = vlaneseq
  %v251 = vshrl.u32 %v250, 7
  %v252 = vsub.s32 0, %v251
  %v253 = vrot.slane %v244, %v252
  %v254 = vadd.f32 %v249, %v253
  %v255 = vxor.u32 %v254, 2147483648
  %v256 = vmul.f32 %v255, 1.442695
  %v257 = vpow.pop %v256
  %v258 = vadd.f32 %v257, 1.0
  %v259 = vrcp.pop %v258
  %v260 = vmul.f32 1.0, %v259
  %261 = vst.msk [vmem:[%s5] sm:$0xff] %vm217, %v260
  // Predicated region
  $region22: #{neural_net_forward.1} parent=0 // pred_check
    _
  $region23: #{neural_net_forward.1} parent=0 // pred_check_branch
    %263 = sbr.rel (0) target = $region25
  $region24: #{neural_net_forward.1} parent=0 // pred_region
    _
  $region25: #{neural_net_forward.1} parent=0 // pred_fallthru
    _
  // Predicated region
  $region26: #{neural_net_forward.1} parent=0 // pred_check
    _
  $region27: #{neural_net_forward.1} parent=0 // pred_check_branch
    %265 = sbr.rel (0) target = $region29
  $region28: #{neural_net_forward.1} parent=0 // pred_region
    _
  $region29: #{neural_net_forward.1} parent=0 // pred_fallthru
    _

</llo_original>
